<compile_context>
chip_gen: v5e
topology: v5e:2x2
jax: 0.10.0
libtpu: 0.0.40
codegen_flags: <defaults>
</compile_context>

<pallas_src>
import functools

import jax
import jax.numpy as jnp
from jax.experimental import pallas as pl
from jax.experimental.pallas import tpu as pltpu


def _round_up(x: int, m: int) -> int:
    return (x + m - 1) // m * m


# ---------------------------------------------------------------------------
# Fused kernel: match (cosine distance) -> top-k (smallest, sorted ascending)
#               -> one-hot MXU gather of prompts -> per-slot counts.
# ---------------------------------------------------------------------------
def _prompt_kernel(q_ref, kn_ref, pf_ref, sim_ref, sel_ref, cnt_ref, *,
                   selection_size, batch, pool, block_b):
    q = q_ref[...].astype(jnp.float32)            # (TB, Dp)  zero-padded
    kn = kn_ref[...].astype(jnp.float32)          # (Pp, Dp)  pre-normalized key

    # q . kn^T without materializing a transpose (contract last dims on MXU).
    raw = jax.lax.dot_general(
        q, kn, dimension_numbers=(((1,), (1,)), ((), ())),
        preferred_element_type=jnp.float32)        # (TB, Pp)

    # torch.cosine_similarity clamps each norm to eps=1e-8; key already unit.
    q_norm = jnp.sqrt(jnp.sum(q * q, axis=-1, keepdims=True))
    q_inv = 1.0 / jnp.maximum(q_norm, 1e-8)
    match = 1.0 - raw * q_inv                      # (TB, Pp)

    tb, pp = match.shape
    col = jax.lax.broadcasted_iota(jnp.int32, (tb, pp), 1)
    row = jax.lax.broadcasted_iota(jnp.int32, (tb, pp), 0)
    g_row = row + pl.program_id(0) * block_b
    row_valid = g_row < batch                      # mask padded batch rows

    big = jnp.float32(1e30)
    work = jnp.where(col < pool, match, big)       # mask padded pool columns

    pf = pf_ref[...]                               # (Pp, LDp) flattened prompts

    sims = []
    counts = jnp.zeros((1, pp), jnp.float32)
    # selection_size is small & static -> fully unrolled (keep visible to LLO).
    # torch.topk(largest=False, sorted=True): ascending values, lowest index
    # wins on ties.
    for s in range(selection_size):
        vmin = jnp.min(work, axis=-1, keepdims=True)                    # (TB,1)
        is_min = work == vmin
        amin = jnp.min(jnp.where(is_min, col, pp), axis=-1, keepdims=True)
        onehot = ((col == amin) & row_valid).astype(jnp.float32)        # (TB,Pp)
        # MXU one-hot gather: selected prompt rows for slot s, lane-dense slab.
        sel_ref[s] = jnp.dot(onehot, pf,
                             preferred_element_type=jnp.float32
                             ).astype(sel_ref.dtype)                    # (TB,LDp)
        counts = counts + jnp.sum(onehot, axis=0, keepdims=True)
        sims.append(vmin)
        work = jnp.where(col == amin, big, work)

    sim_ref[...] = jnp.concatenate(sims, axis=1)   # single (TB, S) store
    cnt_ref[...] = counts[None, :, :]              # (1, 1, Pp)


# ---------------------------------------------------------------------------
# Module-equivalent wrapper
# ---------------------------------------------------------------------------
class PromptPallas:
    def __init__(self, pool_size, selection_size, prompt_len, dimention, rng):
        self.pool_size = pool_size
        self.selection_size = selection_size
        self.prompt_len = prompt_len
        self.dimention = dimention

        k1, k2 = jax.random.split(rng)
        # torch.nn.init.uniform_(-1, 1) equivalents (deterministic here).
        self.key = jax.random.uniform(
            k1, (pool_size, dimention), jnp.float32, -1.0, 1.0)
        self.prompts = jax.random.uniform(
            k2, (pool_size, prompt_len, dimention), jnp.float32, -1.0, 1.0)
        self.frequency = jnp.ones((pool_size,), jnp.float32)
        self.counter = jnp.zeros((pool_size,), jnp.float32)

        # Hoisted, padded operands (recomputed only when parameters change).
        self._Pp = _round_up(pool_size, 128)
        self._Dp = _round_up(dimention, 128)
        self._LDp = _round_up(prompt_len * dimention, 128)
        knorm = self.key / jnp.maximum(
            jnp.linalg.norm(self.key, axis=-1, keepdims=True), 1e-8)
        self._kn_p = jnp.zeros((self._Pp, self._Dp), jnp.float32).at[
            :pool_size, :dimention].set(knorm)
        self._pf_p = jnp.zeros((self._Pp, self._LDp), jnp.float32).at[
            :pool_size, :prompt_len * dimention].set(
                self.prompts.reshape(pool_size, -1))

    def forward(self, query):
        B, D = query.shape
        assert D == self.dimention, (
            f"Query dimention {D} does not match prompt dimention "
            f"{self.dimention}")
        S, L, P = self.selection_size, self.prompt_len, self.pool_size
        Pp, Dp, LDp = self._Pp, self._Dp, self._LDp

        # Batch tiling: multiple of 8, split into <=256-row blocks so the
        # ("parallel",) grid shards across both TensorCores on v7x and keeps
        # per-block VMEM bounded.
        Bp = _round_up(B, 8)
        TB = Bp if Bp <= 256 else 256
        Bp = _round_up(Bp, TB)
        n_tiles = Bp // TB

        q_p = jnp.zeros((Bp, Dp), jnp.float32).at[:B, :D].set(
            query.astype(jnp.float32))

        sim_p, sel_p, cnt_p = pl.pallas_call(
            functools.partial(_prompt_kernel, selection_size=S, batch=B,
                              pool=P, block_b=TB),
            grid=(n_tiles,),
            out_shape=(
                jax.ShapeDtypeStruct((Bp, S), jnp.float32),
                jax.ShapeDtypeStruct((S, Bp, LDp), jnp.float32),
                jax.ShapeDtypeStruct((n_tiles, 1, Pp), jnp.float32),
            ),
            in_specs=[
                pl.BlockSpec((TB, Dp), lambda i: (i, 0)),
                pl.BlockSpec((Pp, Dp), lambda i: (0, 0)),
                pl.BlockSpec((Pp, LDp), lambda i: (0, 0)),
            ],
            out_specs=(
                pl.BlockSpec((TB, S), lambda i: (i, 0)),
                pl.BlockSpec((S, TB, LDp), lambda i: (0, i, 0)),
                pl.BlockSpec((1, 1, Pp), lambda i: (i, 0, 0)),
            ),
            compiler_params=pltpu.CompilerParams(
                dimension_semantics=("parallel",)),
        )(q_p, self._kn_p, self._pf_p)

        similarity = sim_p[:B]                                   # (B, S)
        selection = (sel_p[:, :B, :L * D]
                     .reshape(S, B, L, D)
                     .transpose(1, 0, 2, 3))                     # (B, S, L, D)
        # Buffer side-effect: counter += bincount(topk) (counts from kernel).
        counts = jnp.sum(cnt_p[:, 0, :P], axis=0)
        self.counter = self.counter + counts
        # TODO(synk): training-only branches (_diversed_selection,
        # _batchwise_selection) are not part of the eval forward and are not
        # implemented here.
        return similarity, selection


# ---------------------------------------------------------------------------
if __name__ == "__main__":
    pool_size, selection_size, prompt_len, dim = 8, 2, 5, 32
    B = 2

    root = jax.random.PRNGKey(0)
    k_params, k_query = jax.random.split(root)
    module = PromptPallas(pool_size, selection_size, prompt_len, dim, k_params)
    query = jax.random.normal(k_query, (B, dim), jnp.float32)

    similarity, selection = module.forward(query)
    jax.block_until_ready((similarity, selection, module.counter))

    # Pure-JAX reference check.
    q_norm = jnp.maximum(jnp.linalg.norm(query, axis=-1, keepdims=True), 1e-8)
    k_norm = jnp.maximum(
        jnp.linalg.norm(module.key, axis=-1, keepdims=True), 1e-8)
    match_ref = 1.0 - (query / q_norm) @ (module.key / k_norm).T
    topk_ref = jnp.argsort(match_ref, axis=-1)[:, :selection_size]
    sim_ref = jnp.take_along_axis(match_ref, topk_ref, axis=-1)
    sel_ref = module.prompts[topk_ref]
    cnt_ref = jnp.zeros((pool_size,), jnp.float32).at[
        topk_ref.reshape(-1)].add(1.0)

    assert similarity.shape == (B, selection_size)
    assert selection.shape == (B, selection_size, prompt_len, dim)
    assert jnp.allclose(similarity, sim_ref, atol=1e-5), "similarity mismatch"
    assert jnp.allclose(selection, sel_ref, atol=1e-6), "selection mismatch"
    assert jnp.allclose(module.counter, cnt_ref), "counter mismatch"

    print("KERNEL_OK")
</pallas_src>

<mosaic_0001>
module attributes {stable_mosaic.version = 11 : i64} {
  func.func @_prompt_kernel(%arg0: i32, %arg1: memref<8x128xf32, #tpu.memory_space<vmem>>, %arg2: memref<128x128xf32, #tpu.memory_space<vmem>>, %arg3: memref<128x256xf32, #tpu.memory_space<vmem>>, %arg4: memref<8x2xf32, #tpu.memory_space<vmem>>, %arg5: memref<2x8x256xf32, #tpu.memory_space<vmem>>, %arg6: memref<1x1x128xf32, #tpu.memory_space<vmem>>) attributes {dimension_semantics = [#tpu.dimension_semantics<parallel>], iteration_bounds = array<i64: 1>, scalar_prefetch = 0 : i64, scratch_operands = 0 : i64, tpu.core_type = #tpu.core_type<tc>, window_params = [{transform_indices = @transform_0, window_bounds = array<i64: 8, 128>}, {pipeline_mode = #tpu.pipeline_mode<synchronous>, transform_indices = @transform_1, window_bounds = array<i64: 128, 128>}, {pipeline_mode = #tpu.pipeline_mode<synchronous>, transform_indices = @transform_2, window_bounds = array<i64: 128, 256>}, {transform_indices = @transform_3, window_bounds = array<i64: 8, 2>}, {transform_indices = @transform_4, window_bounds = array<i64: 2, 8, 256>}, {transform_indices = @transform_5, window_bounds = array<i64: 1, 1, 128>}]} {
    %c0 = arith.constant 0 : index
    %c0_0 = arith.constant 0 : index
    %0 = vector.load %arg1[%c0, %c0_0] : memref<8x128xf32, #tpu.memory_space<vmem>>, vector<8x128xf32>
    %c0_1 = arith.constant 0 : index
    %c0_2 = arith.constant 0 : index
    %1 = vector.load %arg2[%c0_1, %c0_2] : memref<128x128xf32, #tpu.memory_space<vmem>>, vector<128x128xf32>
    %cst = arith.constant dense<0.000000e+00> : vector<8x128xf32>
    %2 = tpu.matmul %0, %1, %cst {dimension_numbers = #tpu.dot_dimension_numbers<[1], [1], [0], [0], [0, 0, 1, 0], [], []>} : vector<8x128xf32>, vector<128x128xf32>, vector<8x128xf32> -> vector<8x128xf32>
    %3 = arith.mulf %0, %0 : vector<8x128xf32>
    %cst_3 = arith.constant dense<0.000000e+00> : vector<8xf32>
    %4 = vector.multi_reduction <add>, %3, %cst_3 [1] : vector<8x128xf32> to vector<8xf32>
    %5 = vector.shape_cast %4 : vector<8xf32> to vector<8x1xf32>
    %6 = math.sqrt %5 : vector<8x1xf32>
    %cst_4 = arith.constant 9.99999993E-9 : f32
    %7 = vector.broadcast %cst_4 : f32 to vector<8x1xf32>
    %8 = arith.maximumf %6, %7 : vector<8x1xf32>
    %cst_5 = arith.constant 1.000000e+00 : f32
    %9 = vector.broadcast %cst_5 : f32 to vector<8x1xf32>
    %10 = arith.divf %9, %8 : vector<8x1xf32>
    %11 = vector.broadcast %10 : vector<8x1xf32> to vector<8x128xf32>
    %12 = arith.mulf %2, %11 : vector<8x128xf32>
    %cst_6 = arith.constant 1.000000e+00 : f32
    %13 = vector.broadcast %cst_6 : f32 to vector<8x128xf32>
    %14 = arith.subf %13, %12 : vector<8x128xf32>
    %15 = tpu.iota {dimensions = array<i32: 1>} : vector<8x128xi32>
    %16 = tpu.iota {dimensions = array<i32: 0>} : vector<8x128xi32>
    %c8_i32 = arith.constant 8 : i32
    %17 = arith.muli %arg0, %c8_i32 : i32
    %18 = vector.broadcast %17 : i32 to vector<8x128xi32>
    %19 = arith.addi %16, %18 : vector<8x128xi32>
    %c2_i32 = arith.constant 2 : i32
    %20 = vector.broadcast %c2_i32 : i32 to vector<8x128xi32>
    %21 = arith.cmpi slt, %19, %20 : vector<8x128xi32>
    %c8_i32_7 = arith.constant 8 : i32
    %22 = vector.broadcast %c8_i32_7 : i32 to vector<8x128xi32>
    %23 = arith.cmpi slt, %15, %22 : vector<8x128xi32>
    %cst_8 = arith.constant 1.000000e+30 : f32
    %24 = vector.broadcast %cst_8 : f32 to vector<8x128xf32>
    %25 = arith.select %23, %14, %24 : vector<8x128xi1>, vector<8x128xf32>
    %c0_9 = arith.constant 0 : index
    %c0_10 = arith.constant 0 : index
    %26 = vector.load %arg3[%c0_9, %c0_10] : memref<128x256xf32, #tpu.memory_space<vmem>>, vector<128x256xf32>
    %cst_11 = arith.constant 0.000000e+00 : f32
    %27 = vector.broadcast %cst_11 : f32 to vector<1x128xf32>
    %cst_12 = arith.constant dense<0x7F800000> : vector<8xf32>
    %28 = vector.multi_reduction <minimumf>, %25, %cst_12 [1] : vector<8x128xf32> to vector<8xf32>
    %29 = vector.shape_cast %28 : vector<8xf32> to vector<8x1xf32>
    %30 = vector.broadcast %29 : vector<8x1xf32> to vector<8x128xf32>
    %31 = arith.cmpf oeq, %25, %30 : vector<8x128xf32>
    %c128_i32 = arith.constant 128 : i32
    %32 = vector.broadcast %c128_i32 : i32 to vector<8x128xi32>
    %33 = arith.select %31, %15, %32 : vector<8x128xi1>, vector<8x128xi32>
    %cst_13 = arith.constant dense<2147483647> : vector<8xi32>
    %34 = vector.multi_reduction <minsi>, %33, %cst_13 [1] : vector<8x128xi32> to vector<8xi32>
    %35 = vector.shape_cast %34 : vector<8xi32> to vector<8x1xi32>
    %36 = vector.broadcast %35 : vector<8x1xi32> to vector<8x128xi32>
    %37 = arith.cmpi eq, %15, %36 : vector<8x128xi32>
    %38 = arith.andi %37, %21 : vector<8x128xi1>
    %39 = arith.extui %38 : vector<8x128xi1> to vector<8x128xi32>
    %40 = arith.sitofp %39 : vector<8x128xi32> to vector<8x128xf32>
    %cst_14 = arith.constant dense<0.000000e+00> : vector<8x256xf32>
    %41 = tpu.matmul %40, %26, %cst_14 {dimension_numbers = #tpu.dot_dimension_numbers<[1], [0], [0], [1], [0, 0, 1, 1], [], []>} : vector<8x128xf32>, vector<128x256xf32>, vector<8x256xf32> -> vector<8x256xf32>
    %c0_15 = arith.constant 0 : index
    %c0_16 = arith.constant 0 : index
    %c0_17 = arith.constant 0 : index
    %42 = vector.load %arg5[%c0_15, %c0_16, %c0_17] : memref<2x8x256xf32, #tpu.memory_space<vmem>>, vector<1x8x256xf32>
    %43 = vector.shape_cast %42 : vector<1x8x256xf32> to vector<8x256xf32>
    %44 = vector.shape_cast %41 : vector<8x256xf32> to vector<1x8x256xf32>
    tpu.vector_store %arg5[%c0_15, %c0_16, %c0_17], %44 {strides = array<i32>} : memref<2x8x256xf32, #tpu.memory_space<vmem>>, vector<1x8x256xf32>,
    %cst_18 = arith.constant dense<0.000000e+00> : vector<128xf32>
    %45 = vector.multi_reduction <add>, %40, %cst_18 [0] : vector<8x128xf32> to vector<128xf32>
    %46 = vector.shape_cast %45 : vector<128xf32> to vector<1x128xf32>
    %47 = arith.addf %27, %46 : vector<1x128xf32>
    %48 = vector.broadcast %35 : vector<8x1xi32> to vector<8x128xi32>
    %49 = arith.cmpi eq, %15, %48 : vector<8x128xi32>
    %cst_19 = arith.constant 1.000000e+30 : f32
    %50 = vector.broadcast %cst_19 : f32 to vector<8x128xf32>
    %51 = arith.select %49, %50, %25 : vector<8x128xi1>, vector<8x128xf32>
    %cst_20 = arith.constant dense<0x7F800000> : vector<8xf32>
    %52 = vector.multi_reduction <minimumf>, %51, %cst_20 [1] : vector<8x128xf32> to vector<8xf32>
    %53 = vector.shape_cast %52 : vector<8xf32> to vector<8x1xf32>
    %54 = vector.broadcast %53 : vector<8x1xf32> to vector<8x128xf32>
    %55 = arith.cmpf oeq, %51, %54 : vector<8x128xf32>
    %c128_i32_21 = arith.constant 128 : i32
    %56 = vector.broadcast %c128_i32_21 : i32 to vector<8x128xi32>
    %57 = arith.select %55, %15, %56 : vector<8x128xi1>, vector<8x128xi32>
    %cst_22 = arith.constant dense<2147483647> : vector<8xi32>
    %58 = vector.multi_reduction <minsi>, %57, %cst_22 [1] : vector<8x128xi32> to vector<8xi32>
    %59 = vector.shape_cast %58 : vector<8xi32> to vector<8x1xi32>
    %60 = vector.broadcast %59 : vector<8x1xi32> to vector<8x128xi32>
    %61 = arith.cmpi eq, %15, %60 : vector<8x128xi32>
    %62 = arith.andi %61, %21 : vector<8x128xi1>
    %63 = arith.extui %62 : vector<8x128xi1> to vector<8x128xi32>
    %64 = arith.sitofp %63 : vector<8x128xi32> to vector<8x128xf32>
    %cst_23 = arith.constant dense<0.000000e+00> : vector<8x256xf32>
    %65 = tpu.matmul %64, %26, %cst_23 {dimension_numbers = #tpu.dot_dimension_numbers<[1], [0], [0], [1], [0, 0, 1, 1], [], []>} : vector<8x128xf32>, vector<128x256xf32>, vector<8x256xf32> -> vector<8x256xf32>
    %c1 = arith.constant 1 : index
    %c0_24 = arith.constant 0 : index
    %c0_25 = arith.constant 0 : index
    %66 = vector.load %arg5[%c1, %c0_24, %c0_25] : memref<2x8x256xf32, #tpu.memory_space<vmem>>, vector<1x8x256xf32>
    %67 = vector.shape_cast %66 : vector<1x8x256xf32> to vector<8x256xf32>
    %68 = vector.shape_cast %65 : vector<8x256xf32> to vector<1x8x256xf32>
    tpu.vector_store %arg5[%c1, %c0_24, %c0_25], %68 {strides = array<i32>} : memref<2x8x256xf32, #tpu.memory_space<vmem>>, vector<1x8x256xf32>,
    %cst_26 = arith.constant dense<0.000000e+00> : vector<128xf32>
    %69 = vector.multi_reduction <add>, %64, %cst_26 [0] : vector<8x128xf32> to vector<128xf32>
    %70 = vector.shape_cast %69 : vector<128xf32> to vector<1x128xf32>
    %71 = arith.addf %47, %70 : vector<1x128xf32>
    %72 = tpu.concatenate %29, %53 in 1 : vector<8x1xf32>, vector<8x1xf32> -> vector<8x2xf32>
    %c0_27 = arith.constant 0 : index
    %c0_28 = arith.constant 0 : index
    %73 = vector.load %arg4[%c0_27, %c0_28] : memref<8x2xf32, #tpu.memory_space<vmem>>, vector<8x2xf32>
    tpu.vector_store %arg4[%c0_27, %c0_28], %72 {strides = array<i32>} : memref<8x2xf32, #tpu.memory_space<vmem>>, vector<8x2xf32>,
    %74 = vector.shape_cast %71 : vector<1x128xf32> to vector<1x1x128xf32>
    %c0_29 = arith.constant 0 : index
    %c0_30 = arith.constant 0 : index
    %c0_31 = arith.constant 0 : index
    %75 = vector.load %arg6[%c0_29, %c0_30, %c0_31] : memref<1x1x128xf32, #tpu.memory_space<vmem>>, vector<1x1x128xf32>
    tpu.vector_store %arg6[%c0_29, %c0_30, %c0_31], %74 {strides = array<i32>} : memref<1x1x128xf32, #tpu.memory_space<vmem>>, vector<1x1x128xf32>,
    return
  }
  func.func @transform_0(%arg0: i32) -> (i32, i32) {
    %c0_i32 = arith.constant 0 : i32
    %c0_i32_0 = arith.constant 0 : i32
    return %arg0, %c0_i32 : i32, i32
  }
  func.func @transform_1(%arg0: i32) -> (i32, i32) {
    %c0_i32 = arith.constant 0 : i32
    %c0_i32_0 = arith.constant 0 : i32
    %c0_i32_1 = arith.constant 0 : i32
    return %c0_i32, %c0_i32_0 : i32, i32
  }
  func.func @transform_2(%arg0: i32) -> (i32, i32) {
    %c0_i32 = arith.constant 0 : i32
    %c0_i32_0 = arith.constant 0 : i32
    %c0_i32_1 = arith.constant 0 : i32
    return %c0_i32, %c0_i32_0 : i32, i32
  }
  func.func @transform_3(%arg0: i32) -> (i32, i32) {
    %c0_i32 = arith.constant 0 : i32
    %c0_i32_0 = arith.constant 0 : i32
    return %arg0, %c0_i32 : i32, i32
  }
  func.func @transform_4(%arg0: i32) -> (i32, i32, i32) {
    %c0_i32 = arith.constant 0 : i32
    %c0_i32_0 = arith.constant 0 : i32
    %c0_i32_1 = arith.constant 0 : i32
    return %c0_i32, %arg0, %c0_i32_0 : i32, i32, i32
  }
  func.func @transform_5(%arg0: i32) -> (i32, i32, i32) {
    %c0_i32 = arith.constant 0 : i32
    %c0_i32_0 = arith.constant 0 : i32
    %c0_i32_1 = arith.constant 0 : i32
    return %arg0, %c0_i32, %c0_i32_0 : i32, i32, i32
  }
}

</mosaic_0001>

<llo_original>
// kernel: tpu_custom_call.1
$region0: #{tpu_custom_call.1}
  #allocation0 [shape = 'u32[]', space=smem, size = 0x4, offset = 0x4, fixed_abs, tag = 'smem constant byte address 0x4 - core index']
  #allocation1 [shape = 'u32[72,128]{1,0:T(1,128)}', space=vmem, size = 0x9000, scoped, tag = 'internal scratch']
  %s0 = inlined_call_operand.hbm [shape: f32[8,128], index: 0, kind: input, shape index: {}]
  %s1 = inlined_call_operand.hbm [shape: f32[128,128], index: 1, kind: input, shape index: {}]
  %s2 = inlined_call_operand.hbm [shape: f32[128,256], index: 2, kind: input, shape index: {}]
  %s3 = inlined_call_operand.vmem [shape: f32[8,2], index: 3, kind: output, shape index: {0}]
  %s4 = inlined_call_operand.hbm [shape: f32[2,8,256], index: 4, kind: output, shape index: {1}]
  %s5 = inlined_call_operand.hbm [shape: f32[1,1,128], index: 5, kind: output, shape index: {2}]
  %6 = xla_tuple %s3, %s4, %s5
  %s7 = sld [smem:[#allocation0]]
  $region50: #{tpu_custom_call.1} parent=0
    _
  %s9 = ssub.s32 1, %s7
  %s10 = scalar_select 0, %s9, %s7
  $region1: #{tpu_custom_call.1} parent=0
    #allocation2 [shape = 'u8[4096]{0}', space=vmem, size = 0x1000, scoped, tag = 'input window, operand 0, single buffered']
    #allocation3 [shape = 's32[1]{0}', space=sflag, size = 0x4, scoped, tag = 'scoped memory for tpu_custom_call.1']
    #allocation4 [shape = 's32[1]{0}', space=sflag, size = 0x4, scoped, tag = 'scoped memory for tpu_custom_call.1']
    #allocation5 [shape = 'u8[65536]{0}', space=vmem, size = 0x10000, scoped, tag = 'input window, operand 1, single buffered']
    #allocation6 [shape = 's32[1]{0}', space=sflag, size = 0x4, scoped, tag = 'scoped memory for tpu_custom_call.1']
    #allocation7 [shape = 'u8[131072]{0}', space=vmem, size = 0x20000, scoped, tag = 'input window, operand 2, single buffered']
    #allocation8 [shape = 'u8[16384]{0}', space=vmem, size = 0x4000, scoped, tag = 'output window, operand 1, single buffered']
    #allocation9 [shape = 'u8[512]{0}', space=vmem, size = 0x400, scoped, tag = 'output window, operand 2, single buffered']
    #allocation10 [shape = 's32[1]{0}', space=sflag, size = 0x4, scoped, tag = 'scoped memory for tpu_custom_call.1']
    %11 = vsyncpa [#allocation3], 0
    %12 = vsyncpa [#allocation6], 0
    %13 = vsyncpa [#allocation4], 0
    %14 = vsyncpa [#allocation10], 0
    // Predicated region
    $region2: #{tpu_custom_call.1} parent=1 // pred_check
      _
    $region3: #{tpu_custom_call.1} parent=1 // pred_check_branch
      %16 = sbr.rel (0) target = $region5
    $region4: #{tpu_custom_call.1} parent=1 // pred_region
      %18 = vsyncadd [#allocation3], 0
      %s20 = sshll.u32 %s0, 4
      %s21 = int_to_ptr.hbm [resolvable:$true] %s20
      %s22 = sshll.u32 [#allocation2], 4
      %s23 = int_to_ptr.vmem [resolvable:$true] %s22
      %25 = dma.hbm_to_vmem [thread:$0]  %s21, 128, %s23, [#allocation3]
    $region5: #{tpu_custom_call.1} parent=1 // pred_fallthru
      _
    // Predicated region
    $region6: #{tpu_custom_call.1} parent=1 // pred_check
      _
    $region7: #{tpu_custom_call.1} parent=1 // pred_check_branch
      %27 = sbr.rel (0) target = $region9
    $region8: #{tpu_custom_call.1} parent=1 // pred_region
      %29 = vsyncadd [#allocation6], 0
      %s30 = sshll.u32 %s1, 4
      %s31 = int_to_ptr.hbm [resolvable:$true] %s30
      %s32 = sshll.u32 [#allocation5], 4
      %s33 = int_to_ptr.vmem [resolvable:$true] %s32
      %38 = dma.hbm_to_vmem [thread:$0]  %s31, 2048, %s33, [#allocation6], 128, 128, 8
    $region9: #{tpu_custom_call.1} parent=1 // pred_fallthru
      _
    // Predicated region
    $region10: #{tpu_custom_call.1} parent=1 // pred_check
      _
    $region11: #{tpu_custom_call.1} parent=1 // pred_check_branch
      %40 = sbr.rel (0) target = $region13
    $region12: #{tpu_custom_call.1} parent=1 // pred_region
      %42 = vsyncadd [#allocation6], 0
      %s43 = sshll.u32 %s2, 4
      %s44 = int_to_ptr.hbm [resolvable:$true] %s43
      %s45 = sshll.u32 [#allocation7], 4
      %s46 = int_to_ptr.vmem [resolvable:$true] %s45
      %51 = dma.hbm_to_vmem [thread:$0]  %s44, 4096, %s46, [#allocation6], 256, 256, 16
    $region13: #{tpu_custom_call.1} parent=1 // pred_fallthru
      _
    // Predicated region
    $region14: #{tpu_custom_call.1} parent=1 // pred_check
      _
    $region15: #{tpu_custom_call.1} parent=1 // pred_check_branch
      %53 = sbr.rel (0) target = $region17
    $region16: #{tpu_custom_call.1} parent=1 // pred_region
      %55 = dma.done [#allocation3], 128
    $region17: #{tpu_custom_call.1} parent=1 // pred_fallthru
      _
    // Predicated region
    $region18: #{tpu_custom_call.1} parent=1 // pred_check
      _
    $region19: #{tpu_custom_call.1} parent=1 // pred_check_branch
      %57 = sbr.rel (0) target = $region21
    $region20: #{tpu_custom_call.1} parent=1 // pred_region
      %59 = dma.done [#allocation6], 2048
    $region21: #{tpu_custom_call.1} parent=1 // pred_fallthru
      _
    // Predicated region
    $region22: #{tpu_custom_call.1} parent=1 // pred_check
      _
    $region23: #{tpu_custom_call.1} parent=1 // pred_check_branch
      %61 = sbr.rel (0) target = $region25
    $region24: #{tpu_custom_call.1} parent=1 // pred_region
      %63 = dma.done [#allocation6], 4096
    $region25: #{tpu_custom_call.1} parent=1 // pred_fallthru
      _
    %v64 = vld [vmem:[#allocation2] sm:$0xff]
    %v65 = vld [vmem:[#allocation5] sm:$0xff]
    %v66 = vld [vmem:[#allocation5 + $0x8] sm:$0xff]
    %v67 = vld [vmem:[#allocation5 + $0x10] sm:$0xff]
    %v68 = vld [vmem:[#allocation5 + $0x18] sm:$0xff]
    %v69 = vld [vmem:[#allocation5 + $0x20] sm:$0xff]
    %v70 = vld [vmem:[#allocation5 + $0x28] sm:$0xff]
    %v71 = vld [vmem:[#allocation5 + $0x30] sm:$0xff]
    %v72 = vld [vmem:[#allocation5 + $0x38] sm:$0xff]
    %v73 = vld [vmem:[#allocation5 + $0x40] sm:$0xff]
    %v74 = vld [vmem:[#allocation5 + $0x48] sm:$0xff]
    %v75 = vld [vmem:[#allocation5 + $0x50] sm:$0xff]
    %v76 = vld [vmem:[#allocation5 + $0x58] sm:$0xff]
    %v77 = vld [vmem:[#allocation5 + $0x60] sm:$0xff]
    %v78 = vld [vmem:[#allocation5 + $0x68] sm:$0xff]
    %v79 = vld [vmem:[#allocation5 + $0x70] sm:$0xff]
    %v80 = vld [vmem:[#allocation5 + $0x78] sm:$0xff]
    %81 = vmatpush.xpose.msra.mxu0 %v80
    %82 = vmatpush.xpose.msra.mxu0 %v79
    %83 = vmatpush.xpose.msra.mxu0 %v78
    %84 = vmatpush.xpose.msra.mxu0 %v77
    %85 = vmatpush.xpose.msra.mxu0 %v76
    %86 = vmatpush.xpose.msra.mxu0 %v75
    %87 = vmatpush.xpose.msra.mxu0 %v74
    %88 = vmatpush.xpose.msra.mxu0 %v73
    %89 = vmatpush.xpose.msra.mxu0 %v72
    %90 = vmatpush.xpose.msra.mxu0 %v71
    %91 = vmatpush.xpose.msra.mxu0 %v70
    %92 = vmatpush.xpose.msra.mxu0 %v69
    %93 = vmatpush.xpose.msra.mxu0 %v68
    %94 = vmatpush.xpose.msra.mxu0 %v67
    %95 = vmatpush.xpose.msra.mxu0 %v66
    %96 = vmatpush.xpose.msra.mxu0 %v65
    %97 = vmatmul.f32.gmra.mxu0 %v64
    %v98 = vpop.f32.mrf.mxu0
    %v99 = vadd.f32 0.0, %v98
    %100 = vdwg.mxu0
    %v101 = vmul.f32 %v64, %v64
    %102 = vadd.xlane.f32.xlu0 %v101
    %v103 = vpop.xlane.xlu0 %102
    %v104 = vrsqrt.pop %v103
    %v105 = vmul.f32 %v104, %v103
    %v106 = vmul.f32 %v105, %v104
    %v107 = vmul.f32 0.5, %v106
    %v108 = vsub.f32 1.5, %v107
    %v109 = vmul.f32 %v104, %v108
    %v110 = vmul.f32 %v103, %v109
    %vm111 = vcmp.eq.f32.partialorder %v103, inf
    %v112 = vsel %vm111, %v103, %v110
    %vm113 = vcmp.eq.f32.partialorder %v103, 0.0
    %v114 = vand.u32 %v103, 2147483648
    %v115 = vsel %vm113, %v114, %v112
    %v116 = vmax.f32 %v115, 1e-08
    %v117 = vrcp.pop %v116
    %v118 = vmul.f32 %v116, %v117
    %v119 = vsub.f32 1.0, %v118
    %v120 = vmul.f32 %v117, %v119
    %v121 = vadd.f32 %v117, %v120
    %vm122 = vweird.f32 %v116
    %vm123 = vweird.f32 %v117
    %vm124 = vmor %vm122, %vm123
    %v125 = vsel %vm124, %v117, %v121
    %v126 = vand.u32 2147483647, %v116
    %vm127 = vcmp.eq.f32.partialorder %v126, 8.507059e+37
    %v128 = vand.u32 %v116, 2147483648
    %v129 = vor.u32 1.1754944e-38, %v128
    %v130 = vsel %vm127, %v129, %v125
    %v131 = vmul.f32 1.0, %v130
    %v132 = vmul.f32 %v99, %v131
    %v133 = vsub.f32 1.0, %v132
    %v134 = vlaneseq
    %v135 = vand.u32 %v134, 127
    %v136 = vlaneseq
    %v137 = vshrl.u32 %v136, 7
    %s138 = smul.u32 0, 8
    %v139 = vstv %s138
    %v140 = vadd.s32 %v137, %v139
    %vm141 = vcmp.lt.s32.totalorder %v140, 2
    %vm142 = vcmp.lt.s32.totalorder %v135, 8
    %v143 = vsel %vm142, %v133, 1e+30
    %v144 = vld [vmem:[#allocation7] sm:$0xff]
    %v145 = vld [vmem:[#allocation7 + $0x8] sm:$0xff]
    %v146 = vld [vmem:[#allocation7 + $0x10] sm:$0xff]
    %v147 = vld [vmem:[#allocation7 + $0x18] sm:$0xff]
    %v148 = vld [vmem:[#allocation7 + $0x20] sm:$0xff]
    %v149 = vld [vmem:[#allocation7 + $0x28] sm:$0xff]
    %v150 = vld [vmem:[#allocation7 + $0x30] sm:$0xff]
    %v151 = vld [vmem:[#allocation7 + $0x38] sm:$0xff]
    %v152 = vld [vmem:[#allocation7 + $0x40] sm:$0xff]
    %v153 = vld [vmem:[#allocation7 + $0x48] sm:$0xff]
    %v154 = vld [vmem:[#allocation7 + $0x50] sm:$0xff]
    %v155 = vld [vmem:[#allocation7 + $0x58] sm:$0xff]
    %v156 = vld [vmem:[#allocation7 + $0x60] sm:$0xff]
    %v157 = vld [vmem:[#allocation7 + $0x68] sm:$0xff]
    %v158 = vld [vmem:[#allocation7 + $0x70] sm:$0xff]
    %v159 = vld [vmem:[#allocation7 + $0x78] sm:$0xff]
    %v160 = vld [vmem:[#allocation7 + $0x80] sm:$0xff]
    %v161 = vld [vmem:[#allocation7 + $0x88] sm:$0xff]
    %v162 = vld [vmem:[#allocation7 + $0x90] sm:$0xff]
    %v163 = vld [vmem:[#allocation7 + $0x98] sm:$0xff]
    %v164 = vld [vmem:[#allocation7 + $0xa0] sm:$0xff]
    %v165 = vld [vmem:[#allocation7 + $0xa8] sm:$0xff]
    %v166 = vld [vmem:[#allocation7 + $0xb0] sm:$0xff]
    %v167 = vld [vmem:[#allocation7 + $0xb8] sm:$0xff]
    %v168 = vld [vmem:[#allocation7 + $0xc0] sm:$0xff]
    %v169 = vld [vmem:[#allocation7 + $0xc8] sm:$0xff]
    %v170 = vld [vmem:[#allocation7 + $0xd0] sm:$0xff]
    %v171 = vld [vmem:[#allocation7 + $0xd8] sm:$0xff]
    %v172 = vld [vmem:[#allocation7 + $0xe0] sm:$0xff]
    %v173 = vld [vmem:[#allocation7 + $0xe8] sm:$0xff]
    %v174 = vld [vmem:[#allocation7 + $0xf0] sm:$0xff]
    %v175 = vld [vmem:[#allocation7 + $0xf8] sm:$0xff]
    %176 = vmin.xlane.f32.xlu0 %v143
    %v177 = vpop.xlane.xlu0 %176
    %vm178 = vcmp.eq.f32.partialorder %v143, %v177
    %v179 = vsel %vm178, %v135, 128
    %v180 = vand.u32 %v179, 65535
    %v181 = vshra.s32 %v179, 16
    %v182 = vcvt.s32.f32 %v180
    %v183 = vcvt.s32.f32 %v181
    %184 = vmin.xlane.f32.xlu0 %v183
    %v185 = vpop.xlane.xlu0 %184
    %vm186 = vcmp.eq.f32.partialorder %v183, %v185
    %v187 = vsel %vm186, %v182, inf
    %188 = vmin.xlane.f32.xlu0 %v187
    %v189 = vpop.xlane.xlu0 %188
    %v190 = vcvt.f32.s32 %v189
    %v191 = vcvt.f32.s32 %v185
    %v192 = vshll.u32 %v191, 16
    %v193 = vadd.s32 %v192, %v190
    %vm194 = vcmp.eq.s32.totalorder %v135, %v193
    %vm195 = vmand %vm194, %vm141
    %v196 = vsel %vm195, 1, 0
    %v197 = vcvt.s32.f32 %v196
    %198 = vmatpush.msra.mxu0 %v174
    %199 = vmatpush.msra.mxu0 %v172
    %200 = vmatpush.msra.mxu0 %v170
    %201 = vmatpush.msra.mxu0 %v168
    %202 = vmatpush.msra.mxu0 %v166
    %203 = vmatpush.msra.mxu0 %v164
    %204 = vmatpush.msra.mxu0 %v162
    %205 = vmatpush.msra.mxu0 %v160
    %206 = vmatpush.msra.mxu0 %v158
    %207 = vmatpush.msra.mxu0 %v156
    %208 = vmatpush.msra.mxu0 %v154
    %209 = vmatpush.msra.mxu0 %v152
    %210 = vmatpush.msra.mxu0 %v150
    %211 = vmatpush.msra.mxu0 %v148
    %212 = vmatpush.msra.mxu0 %v146
    %213 = vmatpush.msra.mxu0 %v144
    %214 = vmatmul.f32.gmra.mxu0 %v197
    %v215 = vpop.f32.mrf.mxu0
    %v216 = vadd.f32 0.0, %v215
    %217 = vdwg.mxu0
    %218 = vmatpush.msra.mxu0 %v175
    %219 = vmatpush.msra.mxu0 %v173
    %220 = vmatpush.msra.mxu0 %v171
    %221 = vmatpush.msra.mxu0 %v169
    %222 = vmatpush.msra.mxu0 %v167
    %223 = vmatpush.msra.mxu0 %v165
    %224 = vmatpush.msra.mxu0 %v163
    %225 = vmatpush.msra.mxu0 %v161
    %226 = vmatpush.msra.mxu0 %v159
    %227 = vmatpush.msra.mxu0 %v157
    %228 = vmatpush.msra.mxu0 %v155
    %229 = vmatpush.msra.mxu0 %v153
    %230 = vmatpush.msra.mxu0 %v151
    %231 = vmatpush.msra.mxu0 %v149
    %232 = vmatpush.msra.mxu0 %v147
    %233 = vmatpush.msra.mxu0 %v145
    %234 = vmatmul.f32.gmra.mxu0 %v197
    %v235 = vpop.f32.mrf.mxu0
    %v236 = vadd.f32 0.0, %v235
    %237 = vdwg.mxu0
    %238 = vst [vmem:[#allocation8] sm:$0xff] %v216
    %239 = vst [vmem:[#allocation8 + $0x8] sm:$0xff] %v236
    %v240 = vrot.slane %v197, 4
    %v241 = vadd.f32 %v197, %v240
    %v242 = vrot.slane %v241, 2
    %v243 = vadd.f32 %v241, %v242
    %v244 = vrot.slane %v243, 1
    %v245 = vadd.f32 %v243, %v244
    %v246 = vadd.f32 %v245, 0.0
    %v247 = vsel %vm194, 1e+30, %v143
    %248 = vmin.xlane.f32.xlu0 %v247
    %v249 = vpop.xlane.xlu0 %248
    %vm250 = vcmp.eq.f32.partialorder %v247, %v249
    %v251 = vsel %vm250, %v135, 128
    %v252 = vand.u32 %v251, 65535
    %v253 = vshra.s32 %v251, 16
    %v254 = vcvt.s32.f32 %v252
    %v255 = vcvt.s32.f32 %v253
    %256 = vmin.xlane.f32.xlu0 %v255
    %v257 = vpop.xlane.xlu0 %256
    %vm258 = vcmp.eq.f32.partialorder %v255, %v257
    %v259 = vsel %vm258, %v254, inf
    %260 = vmin.xlane.f32.xlu0 %v259
    %v261 = vpop.xlane.xlu0 %260
    %v262 = vcvt.f32.s32 %v261
    %v263 = vcvt.f32.s32 %v257
    %v264 = vshll.u32 %v263, 16
    %v265 = vadd.s32 %v264, %v262
    %vm266 = vcmp.eq.s32.totalorder %v135, %v265
    %vm267 = vmand %vm266, %vm141
    %v268 = vsel %vm267, 1, 0
    %v269 = vcvt.s32.f32 %v268
    %270 = vmatpush.msra.mxu0 %v174
    %271 = vmatpush.msra.mxu0 %v172
    %272 = vmatpush.msra.mxu0 %v170
    %273 = vmatpush.msra.mxu0 %v168
    %274 = vmatpush.msra.mxu0 %v166
    %275 = vmatpush.msra.mxu0 %v164
    %276 = vmatpush.msra.mxu0 %v162
    %277 = vmatpush.msra.mxu0 %v160
    %278 = vmatpush.msra.mxu0 %v158
    %279 = vmatpush.msra.mxu0 %v156
    %280 = vmatpush.msra.mxu0 %v154
    %281 = vmatpush.msra.mxu0 %v152
    %282 = vmatpush.msra.mxu0 %v150
    %283 = vmatpush.msra.mxu0 %v148
    %284 = vmatpush.msra.mxu0 %v146
    %285 = vmatpush.msra.mxu0 %v144
    %286 = vmatmul.f32.gmra.mxu0 %v269
    %v287 = vpop.f32.mrf.mxu0
    %v288 = vadd.f32 0.0, %v287
    %289 = vdwg.mxu0
    %290 = vmatpush.msra.mxu0 %v175
    %291 = vmatpush.msra.mxu0 %v173
    %292 = vmatpush.msra.mxu0 %v171
    %293 = vmatpush.msra.mxu0 %v169
    %294 = vmatpush.msra.mxu0 %v167
    %295 = vmatpush.msra.mxu0 %v165
    %296 = vmatpush.msra.mxu0 %v163
    %297 = vmatpush.msra.mxu0 %v161
    %298 = vmatpush.msra.mxu0 %v159
    %299 = vmatpush.msra.mxu0 %v157
    %300 = vmatpush.msra.mxu0 %v155
    %301 = vmatpush.msra.mxu0 %v153
    %302 = vmatpush.msra.mxu0 %v151
    %303 = vmatpush.msra.mxu0 %v149
    %304 = vmatpush.msra.mxu0 %v147
    %305 = vmatpush.msra.mxu0 %v145
    %306 = vmatmul.f32.gmra.mxu0 %v269
    %v307 = vpop.f32.mrf.mxu0
    %v308 = vadd.f32 0.0, %v307
    %309 = vdwg.mxu0
    %s310 = scalar_lea.vmem [#allocation8], 16
    %311 = vst [vmem:[%s310] sm:$0xff] %v288
    %312 = vst [vmem:[%s310 + $0x8] sm:$0xff] %v308
    %v313 = vrot.slane %v269, 4
    %v314 = vadd.f32 %v269, %v313
    %v315 = vrot.slane %v314, 2
    %v316 = vadd.f32 %v314, %v315
    %v317 = vrot.slane %v316, 1
    %v318 = vadd.f32 %v316, %v317
    %v319 = vadd.f32 %v246, %v318
    %vm320 = vcmask 7168
    %v321 = vsel %vm320, %v177, %v249
    %vm322 = vcmask 15360
    %323 = vst.msk [vmem:[%s3] sm:$0xff] %vm322, %v321
    %324 = vst [vmem:[#allocation9] sm:$0x1] %v319
    // Predicated region
    $region26: #{tpu_custom_call.1} parent=1 // pred_check
      _
    $region27: #{tpu_custom_call.1} parent=1 // pred_check_branch
      %326 = sbr.rel (0) target = $region29
    $region28: #{tpu_custom_call.1} parent=1 // pred_region
      _
    $region29: #{tpu_custom_call.1} parent=1 // pred_fallthru
      _
    // Predicated region
    $region30: #{tpu_custom_call.1} parent=1 // pred_check
      _
    $region31: #{tpu_custom_call.1} parent=1 // pred_check_branch
      %328 = sbr.rel (0) target = $region33
    $region32: #{tpu_custom_call.1} parent=1 // pred_region
      %330 = vsyncadd [#allocation4], 0
      %s331 = sshll.u32 [#allocation8], 4
      %s332 = int_to_ptr.vmem [resolvable:$true] %s331
      %s333 = sshll.u32 %s4, 4
      %s334 = int_to_ptr.hbm [resolvable:$true] %s333
      %339 = dma.vmem_to_hbm [thread:$0]  %s332, 512, %s334, [#allocation4], 256, 256, 16
    $region33: #{tpu_custom_call.1} parent=1 // pred_fallthru
      _
    // Predicated region
    $region34: #{tpu_custom_call.1} parent=1 // pred_check
      _
    $region35: #{tpu_custom_call.1} parent=1 // pred_check_branch
      %341 = sbr.rel (0) target = $region37
    $region36: #{tpu_custom_call.1} parent=1 // pred_region
      %343 = vsyncadd [#allocation10], 0
      %s345 = sshll.u32 [#allocation9], 4
      %s346 = int_to_ptr.vmem [resolvable:$true] %s345
      %s347 = sshll.u32 %s5, 4
      %s348 = int_to_ptr.hbm [resolvable:$true] %s347
      %350 = dma.vmem_to_hbm [thread:$0]  %s346, 16, %s348, [#allocation10]
    $region37: #{tpu_custom_call.1} parent=1 // pred_fallthru
      _
    // Predicated region
    $region38: #{tpu_custom_call.1} parent=1 // pred_check
      _
    $region39: #{tpu_custom_call.1} parent=1 // pred_check_branch
      %352 = sbr.rel (0) target = $region41
    $region40: #{tpu_custom_call.1} parent=1 // pred_region
      _
    $region41: #{tpu_custom_call.1} parent=1 // pred_fallthru
      _
    // Predicated region
    $region42: #{tpu_custom_call.1} parent=1 // pred_check
      _
    $region43: #{tpu_custom_call.1} parent=1 // pred_check_branch
      %354 = sbr.rel (0) target = $region45
    $region44: #{tpu_custom_call.1} parent=1 // pred_region
      %356 = dma.done [#allocation4], 512
    $region45: #{tpu_custom_call.1} parent=1 // pred_fallthru
      _
    // Predicated region
    $region46: #{tpu_custom_call.1} parent=1 // pred_check
      _
    $region47: #{tpu_custom_call.1} parent=1 // pred_check_branch
      %358 = sbr.rel (0) target = $region49
    $region48: #{tpu_custom_call.1} parent=1 // pred_region
      %360 = dma.done [#allocation10], 16
    $region49: #{tpu_custom_call.1} parent=1 // pred_fallthru
      _
    %361 = vsyncpa [#allocation3], 1
    %362 = vsyncpa [#allocation6], 1
    %363 = vsyncpa [#allocation4], 1
    %364 = vsyncpa [#allocation10], 1

</llo_original>
